<compile_context>
chip_gen: v6e
topology: v6e:2x2x1
jax: 0.10.0
libtpu: 0.0.40
codegen_flags: <defaults>
</compile_context>

<pallas_src>
import functools

import jax
import jax.numpy as jnp
from jax.experimental import pallas as pl
from jax.experimental.pallas import tpu as pltpu

_LANE = 128


def _round_up(x, m):
    return ((x + m - 1) // m) * m


def _pick_col_chunk(h4p, tk_request):
    """Largest multiple of 128 that divides h4p and is <= tk_request."""
    m = h4p // _LANE
    d = max(1, min(m, tk_request // _LANE))
    while m % d:
        d -= 1
    return d * _LANE


def _vmem_limit_bytes(default=48 * 1024 * 1024):
    # Raise the scoped-VMEM limit toward physical capacity (128 MiB on
    # v5e/v6e, 64 MiB on v7x) so resident weights fit for larger H.
    try:
        cap = int(pltpu.get_tpu_info().vmem_capacity_bytes)
        return max(default, (cap // 8) * 7)
    except Exception:
        return default


def _mlp_kernel(
    emb_ref,   # (TM, H)        bf16  batch tile of emb
    w1_ref,    # (H, H4P)       bf16  dense1 weight [in, out], VMEM-resident
    b1_ref,    # (1, H4P)       f32
    wss_ref,   # (2, H4P, TK)   bf16  [0]=scale, [1]=shift column chunk
    bss_ref,   # (2, 1, TK)     f32
    wo_ref,    # (TK, HP)       bf16  out-weight row chunk (lane-padded cols)
    bo_ref,    # (1, HP)        f32
    out_ref,   # (TM, HP)       out dtype
    h_ref,     # (TM, H4P)      bf16 scratch: silu(dense1(emb))
    acc_ref,   # (TM, HP)       f32  scratch: out accumulator
):
    c = pl.program_id(1)
    tk = wo_ref.shape[0]

    # ---- once per M tile: mlp_h = silu(dense1(emb)); zero the accumulator ---
    @pl.when(c == 0)
    def _():
        h = jnp.dot(emb_ref[...], w1_ref[...],
                    preferred_element_type=jnp.float32) + b1_ref[...]
        h_ref[...] = (h * jax.nn.sigmoid(h)).astype(jnp.bfloat16)  # SiLU
        acc_ref[...] = jnp.zeros_like(acc_ref)

    # ---- per column chunk: scale/shift, modulate, accumulate out matmul -----
    hb = h_ref[...]                                              # (TM, H4P) bf16
    scale = jnp.dot(hb, wss_ref[0],
                    preferred_element_type=jnp.float32) + bss_ref[0]
    shift = jnp.dot(hb, wss_ref[1],
                    preferred_element_type=jnp.float32) + bss_ref[1]
    col0 = pl.multiple_of(c * tk, _LANE)
    h_c = h_ref[:, pl.ds(col0, tk)].astype(jnp.float32)          # (TM, TK)
    mod = h_c * (1.0 + scale) + shift          # mlp_h * (1 + scale) + shift
    # (transformer_dropout == 0.0 -> dropout branch skipped, as in reference)
    acc_ref[...] += jnp.dot(mod.astype(jnp.bfloat16), wo_ref[...],
                            preferred_element_type=jnp.float32)

    # ---- finalize: out = self.out(mlp_h) -------------------------------------
    @pl.when(c == pl.num_programs(1) - 1)
    def _():
        out_ref[...] = (acc_ref[...] + bo_ref[...]).astype(out_ref.dtype)


@functools.partial(jax.jit, static_argnames=("tm", "tk", "out_dtype"))
def mlp_forward(x, emb, params, *, tm=128, tk=512, out_dtype=jnp.float32):
    # `x` only feeds the dead `self.norm(x)` in the reference forward; it is
    # accepted for interface fidelity but intentionally unused.
    del x

    B, H = emb.shape
    w1, b1 = params["w1_t"], params["b1"]
    wss, bss = params["wss_t"], params["bss"]
    wo, bo = params["wo_t"], params["bo"]
    H4P = w1.shape[1]          # padded 4*hidden_size (multiple of 128)
    HP = wo.shape[1]           # lane-padded output width (multiple of 128)

    # Adaptive M tile: tiny batches use a 16-row (bf16 sublane) tile instead of
    # padding to 128 rows.
    tm_eff = max(16, min(tm, _round_up(B, 16)))
    MP = pl.cdiv(B, tm_eff) * tm_eff
    n_m = MP // tm_eff

    emb_b = emb.astype(jnp.bfloat16)
    if MP != B:  # tiny bf16 pad only when needed
        emb_b = jnp.zeros((MP, H), jnp.bfloat16).at[:B].set(emb_b)

    # Column chunk over the 4H dimension (N of scale/shift matmuls, K of out).
    tk_eff = _pick_col_chunk(H4P, tk)
    n_c = H4P // tk_eff

    const = dict(pipeline_mode=pl.Buffered(1))   # fetch once, single buffer

    flops = 2 * MP * (H * H4P + 2 * H4P * H4P + H4P * HP)
    transcendentals = MP * H4P  # sigmoid in SiLU
    bytes_accessed = (
        emb_b.size * 2
        + w1.size * 2 + b1.size * 4 + bo.size * 4           # resident weights
        + n_m * (wss.size * 2 + bss.size * 4 + wo.size * 2)  # streamed per M tile
        + MP * HP * jnp.dtype(out_dtype).itemsize
    )

    out_p = pl.pallas_call(
        _mlp_kernel,
        out_shape=jax.ShapeDtypeStruct((MP, HP), out_dtype),
        grid=(n_m, n_c),
        in_specs=[
            pl.BlockSpec((tm_eff, H), lambda i, c: (i, 0)),          # emb tile
            pl.BlockSpec(w1.shape, lambda i, c: (0, 0), **const),    # dense1 W
            pl.BlockSpec(b1.shape, lambda i, c: (0, 0), **const),    # dense1 b
            pl.BlockSpec((2, H4P, tk_eff), lambda i, c: (0, 0, c)),  # scale/shift W chunk
            pl.BlockSpec((2, 1, tk_eff), lambda i, c: (0, 0, c)),    # scale/shift b chunk
            pl.BlockSpec((tk_eff, HP), lambda i, c: (c, 0)),         # out W row chunk
            pl.BlockSpec(bo.shape, lambda i, c: (0, 0), **const),    # out b
        ],
        out_specs=pl.BlockSpec((tm_eff, HP), lambda i, c: (i, 0)),
        scratch_shapes=[
            pltpu.VMEM((tm_eff, H4P), jnp.bfloat16),   # silu(dense1(emb))
            pltpu.VMEM((tm_eff, HP), jnp.float32),     # out accumulator
        ],
        compiler_params=pltpu.CompilerParams(
            dimension_semantics=("parallel", "arbitrary"),
            vmem_limit_bytes=_vmem_limit_bytes(),
        ),
        cost_estimate=pl.CostEstimate(
            flops=flops,
            transcendentals=transcendentals,
            bytes_accessed=bytes_accessed,
        ),
    )(emb_b, w1, b1, wss, bss, wo, bo)

    return out_p[:B, :H]


def init_params(key, hidden_size, embedding_dim):
    """Deterministic synthetic parameters.

    PyTorch Linear weights are [out, in]; stored transposed ([in, out]) so the
    kernel computes y = x @ W + b. The scale/shift weights are stacked into a
    single (2, 4H, 4H) array (one DMA stream, chunkable over columns). The 4H
    dimension and the out-projection output width are zero-padded to multiples
    of 128 so every block split is lane-aligned.
    """
    assert embedding_dim == 4 * hidden_size, (
        "reference forward only typechecks when embedding_dim == 4*hidden_size")
    H, H4 = hidden_size, 4 * hidden_size
    H4P = _round_up(H4, _LANE)
    HP = _round_up(H, _LANE)
    ks = jax.random.split(key, 4)

    def linear_w(k, out_dim, in_dim):
        return (0.02 * jax.random.normal(k, (out_dim, in_dim), jnp.float32)).T

    w1 = linear_w(ks[0], H4, H)       # dense1: (H, 4H)
    ws = linear_w(ks[1], H4, H4)      # scale:  (4H, 4H)  (embedding_dim == 4H)
    wsh = linear_w(ks[2], H4, H4)     # shift:  (4H, 4H)
    wo = linear_w(ks[3], H, H4)       # out:    (4H, H)

    w1_p = jnp.zeros((H, H4P), jnp.float32).at[:, :H4].set(w1)
    ws_p = jnp.zeros((H4P, H4P), jnp.float32).at[:H4, :H4].set(ws)
    wsh_p = jnp.zeros((H4P, H4P), jnp.float32).at[:H4, :H4].set(wsh)
    wo_p = jnp.zeros((H4P, HP), jnp.float32).at[:H4, :H].set(wo)

    return {
        "w1_t": w1_p.astype(jnp.bfloat16),
        "b1": jnp.zeros((1, H4P), jnp.float32),
        "wss_t": jnp.stack([ws_p, wsh_p]).astype(jnp.bfloat16),  # (2, 4H, 4H)
        "bss": jnp.zeros((2, 1, H4P), jnp.float32),
        "wo_t": wo_p.astype(jnp.bfloat16),
        "bo": jnp.zeros((1, HP), jnp.float32),
        # LayerNorm params kept for module completeness; the reference's
        # norm(x) result is dead, so the kernel never consumes these.
        "ln_gamma": jnp.ones((1, embedding_dim), jnp.float32),
        "ln_beta": jnp.zeros((1, embedding_dim), jnp.float32),
    }


if __name__ == "__main__":
    hidden_size = 32
    embedding_dim = 4 * hidden_size  # 128
    B, S = 2, 8

    key = jax.random.PRNGKey(0)
    kx, ke, kp = jax.random.split(key, 3)
    x = jax.random.normal(kx, (B, S, embedding_dim), jnp.float32)
    emb = jax.random.normal(ke, (B, hidden_size), jnp.float32)
    params = init_params(kp, hidden_size, embedding_dim)

    out = mlp_forward(x, emb, params)
    jax.block_until_ready(out)
    assert out.shape == (B, hidden_size) and out.dtype == jnp.float32

    # Pure-JAX sanity reference (same bf16 weights, f32 math).
    w1f = params["w1_t"].astype(jnp.float32)
    wssf = params["wss_t"].astype(jnp.float32)
    wof = params["wo_t"].astype(jnp.float32)
    h = emb @ w1f + params["b1"]
    h = h * jax.nn.sigmoid(h)
    scale = h @ wssf[0] + params["bss"][0]
    shift = h @ wssf[1] + params["bss"][1]
    mod = h * (1.0 + scale) + shift
    ref = (mod @ wof + params["bo"])[:, :hidden_size]
    assert jnp.allclose(out, ref, atol=1e-2, rtol=1e-1), "kernel/reference mismatch"

    print("KERNEL_OK")
</pallas_src>

<mosaic_0001>
module attributes {stable_mosaic.version = 11 : i64} {
  func.func @_mlp_kernel(%arg0: i32, %arg1: i32, %arg2: memref<16x32xbf16, #tpu.memory_space<vmem>>, %arg3: memref<32x128xbf16, #tpu.memory_space<vmem>>, %arg4: memref<1x128xf32, #tpu.memory_space<vmem>>, %arg5: memref<2x128x128xbf16, #tpu.memory_space<vmem>>, %arg6: memref<2x1x128xf32, #tpu.memory_space<vmem>>, %arg7: memref<128x128xbf16, #tpu.memory_space<vmem>>, %arg8: memref<1x128xf32, #tpu.memory_space<vmem>>, %arg9: memref<16x128xf32, #tpu.memory_space<vmem>>, %arg10: memref<16x128xbf16, #tpu.memory_space<vmem>>, %arg11: memref<16x128xf32, #tpu.memory_space<vmem>>) attributes {dimension_semantics = [#tpu.dimension_semantics<parallel>, #tpu.dimension_semantics<arbitrary>], iteration_bounds = array<i64: 1, 1>, scalar_prefetch = 0 : i64, scratch_operands = 2 : i64, tpu.core_type = #tpu.core_type<tc>, window_params = [{transform_indices = @transform_0, window_bounds = array<i64: 16, 32>}, {pipeline_mode = #tpu.pipeline_mode<synchronous>, transform_indices = @transform_1, window_bounds = array<i64: 32, 128>}, {pipeline_mode = #tpu.pipeline_mode<synchronous>, transform_indices = @transform_2, window_bounds = array<i64: 1, 128>}, {transform_indices = @transform_3, window_bounds = array<i64: 2, 128, 128>}, {transform_indices = @transform_4, window_bounds = array<i64: 2, 1, 128>}, {transform_indices = @transform_5, window_bounds = array<i64: 128, 128>}, {pipeline_mode = #tpu.pipeline_mode<synchronous>, transform_indices = @transform_6, window_bounds = array<i64: 1, 128>}, {transform_indices = @transform_7, window_bounds = array<i64: 16, 128>}]} {
    %c0_i32 = arith.constant 0 : i32
    %0 = arith.cmpi eq, %arg1, %c0_i32 : i32
    %1 = arith.extui %0 : i1 to i32
    %c0_i32_0 = arith.constant 0 : i32
    %2 = arith.cmpi ne, %1, %c0_i32_0 : i32
    scf.if %2 {
      %c0_25 = arith.constant 0 : index
      %c0_26 = arith.constant 0 : index
      %36 = vector.load %arg2[%c0_25, %c0_26] : memref<16x32xbf16, #tpu.memory_space<vmem>>, vector<16x32xbf16>
      %c0_27 = arith.constant 0 : index
      %c0_28 = arith.constant 0 : index
      %37 = vector.load %arg3[%c0_27, %c0_28] : memref<32x128xbf16, #tpu.memory_space<vmem>>, vector<32x128xbf16>
      %cst_29 = arith.constant dense<0.000000e+00> : vector<16x128xf32>
      %38 = tpu.matmul %36, %37, %cst_29 {dimension_numbers = #tpu.dot_dimension_numbers<[1], [0], [0], [1], [0, 0, 1, 1], [], []>} : vector<16x32xbf16>, vector<32x128xbf16>, vector<16x128xf32> -> vector<16x128xf32>
      %c0_30 = arith.constant 0 : index
      %c0_31 = arith.constant 0 : index
      %39 = vector.load %arg4[%c0_30, %c0_31] : memref<1x128xf32, #tpu.memory_space<vmem>>, vector<1x128xf32>
      %40 = vector.broadcast %39 : vector<1x128xf32> to vector<16x128xf32>
      %41 = arith.addf %38, %40 : vector<16x128xf32>
      %42 = arith.negf %41 : vector<16x128xf32>
      %43 = math.exp %42 : vector<16x128xf32>
      %cst_32 = arith.constant 1.000000e+00 : f32
      %44 = vector.broadcast %cst_32 : f32 to vector<16x128xf32>
      %45 = arith.addf %44, %43 : vector<16x128xf32>
      %46 = arith.divf %44, %45 : vector<16x128xf32>
      %47 = arith.mulf %41, %46 : vector<16x128xf32>
      %48 = arith.truncf %47 : vector<16x128xf32> to vector<16x128xbf16>
      %c0_33 = arith.constant 0 : index
      %c0_34 = arith.constant 0 : index
      %49 = vector.load %arg10[%c0_33, %c0_34] : memref<16x128xbf16, #tpu.memory_space<vmem>>, vector<16x128xbf16>
      tpu.vector_store %arg10[%c0_33, %c0_34], %48 {strides = array<i32>} : memref<16x128xbf16, #tpu.memory_space<vmem>>, vector<16x128xbf16>,
      %cst_35 = arith.constant 0.000000e+00 : f32
      %50 = vector.broadcast %cst_35 : f32 to vector<16x128xf32>
      %c0_36 = arith.constant 0 : index
      %c0_37 = arith.constant 0 : index
      %51 = vector.load %arg11[%c0_36, %c0_37] : memref<16x128xf32, #tpu.memory_space<vmem>>, vector<16x128xf32>
      tpu.vector_store %arg11[%c0_36, %c0_37], %50 {strides = array<i32>} : memref<16x128xf32, #tpu.memory_space<vmem>>, vector<16x128xf32>,
    } else {
    }
    %c0 = arith.constant 0 : index
    %c0_1 = arith.constant 0 : index
    %3 = vector.load %arg10[%c0, %c0_1] : memref<16x128xbf16, #tpu.memory_space<vmem>>, vector<16x128xbf16>
    %c0_2 = arith.constant 0 : index
    %c0_3 = arith.constant 0 : index
    %c0_4 = arith.constant 0 : index
    %4 = vector.load %arg5[%c0_2, %c0_3, %c0_4] : memref<2x128x128xbf16, #tpu.memory_space<vmem>>, vector<1x128x128xbf16>
    %5 = vector.shape_cast %4 : vector<1x128x128xbf16> to vector<128x128xbf16>
    %cst = arith.constant dense<0.000000e+00> : vector<16x128xf32>
    %6 = tpu.matmul %3, %5, %cst {dimension_numbers = #tpu.dot_dimension_numbers<[1], [0], [0], [1], [0, 0, 1, 1], [], []>} : vector<16x128xbf16>, vector<128x128xbf16>, vector<16x128xf32> -> vector<16x128xf32>
    %c0_5 = arith.constant 0 : index
    %c0_6 = arith.constant 0 : index
    %c0_7 = arith.constant 0 : index
    %7 = vector.load %arg6[%c0_5, %c0_6, %c0_7] : memref<2x1x128xf32, #tpu.memory_space<vmem>>, vector<1x1x128xf32>
    %8 = vector.shape_cast %7 : vector<1x1x128xf32> to vector<1x128xf32>
    %9 = vector.broadcast %8 : vector<1x128xf32> to vector<16x128xf32>
    %10 = arith.addf %6, %9 : vector<16x128xf32>
    %c1 = arith.constant 1 : index
    %c0_8 = arith.constant 0 : index
    %c0_9 = arith.constant 0 : index
    %11 = vector.load %arg5[%c1, %c0_8, %c0_9] : memref<2x128x128xbf16, #tpu.memory_space<vmem>>, vector<1x128x128xbf16>
    %12 = vector.shape_cast %11 : vector<1x128x128xbf16> to vector<128x128xbf16>
    %cst_10 = arith.constant dense<0.000000e+00> : vector<16x128xf32>
    %13 = tpu.matmul %3, %12, %cst_10 {dimension_numbers = #tpu.dot_dimension_numbers<[1], [0], [0], [1], [0, 0, 1, 1], [], []>} : vector<16x128xbf16>, vector<128x128xbf16>, vector<16x128xf32> -> vector<16x128xf32>
    %c1_11 = arith.constant 1 : index
    %c0_12 = arith.constant 0 : index
    %c0_13 = arith.constant 0 : index
    %14 = vector.load %arg6[%c1_11, %c0_12, %c0_13] : memref<2x1x128xf32, #tpu.memory_space<vmem>>, vector<1x1x128xf32>
    %15 = vector.shape_cast %14 : vector<1x1x128xf32> to vector<1x128xf32>
    %16 = vector.broadcast %15 : vector<1x128xf32> to vector<16x128xf32>
    %17 = arith.addf %13, %16 : vector<16x128xf32>
    %c128_i32 = arith.constant 128 : i32
    %18 = arith.muli %arg1, %c128_i32 : i32
    %19 = tpu.assume_multiple %18, 128 : i32
    %c0_14 = arith.constant 0 : index
    %20 = arith.index_cast %19 : i32 to index
    %21 = vector.load %arg10[%c0_14, %20] : memref<16x128xbf16, #tpu.memory_space<vmem>>, vector<16x128xbf16>
    %22 = arith.extf %21 : vector<16x128xbf16> to vector<16x128xf32>
    %cst_15 = arith.constant 1.000000e+00 : f32
    %23 = vector.broadcast %cst_15 : f32 to vector<16x128xf32>
    %24 = arith.addf %23, %10 : vector<16x128xf32>
    %25 = arith.mulf %22, %24 : vector<16x128xf32>
    %26 = arith.addf %25, %17 : vector<16x128xf32>
    %c0_16 = arith.constant 0 : index
    %c0_17 = arith.constant 0 : index
    %27 = vector.load %arg11[%c0_16, %c0_17] : memref<16x128xf32, #tpu.memory_space<vmem>>, vector<16x128xf32>
    %28 = arith.truncf %26 : vector<16x128xf32> to vector<16x128xbf16>
    %c0_18 = arith.constant 0 : index
    %c0_19 = arith.constant 0 : index
    %29 = vector.load %arg7[%c0_18, %c0_19] : memref<128x128xbf16, #tpu.memory_space<vmem>>, vector<128x128xbf16>
    %cst_20 = arith.constant dense<0.000000e+00> : vector<16x128xf32>
    %30 = tpu.matmul %28, %29, %cst_20 {dimension_numbers = #tpu.dot_dimension_numbers<[1], [0], [0], [1], [0, 0, 1, 1], [], []>} : vector<16x128xbf16>, vector<128x128xbf16>, vector<16x128xf32> -> vector<16x128xf32>
    %31 = arith.addf %27, %30 : vector<16x128xf32>
    %c0_21 = arith.constant 0 : index
    %c0_22 = arith.constant 0 : index
    %32 = vector.load %arg11[%c0_21, %c0_22] : memref<16x128xf32, #tpu.memory_space<vmem>>, vector<16x128xf32>
    tpu.vector_store %arg11[%c0_21, %c0_22], %31 {strides = array<i32>} : memref<16x128xf32, #tpu.memory_space<vmem>>, vector<16x128xf32>,
    %c0_i32_23 = arith.constant 0 : i32
    %33 = arith.cmpi eq, %arg1, %c0_i32_23 : i32
    %34 = arith.extui %33 : i1 to i32
    %c0_i32_24 = arith.constant 0 : i32
    %35 = arith.cmpi ne, %34, %c0_i32_24 : i32
    scf.if %35 {
      %c0_25 = arith.constant 0 : index
      %c0_26 = arith.constant 0 : index
      %36 = vector.load %arg11[%c0_25, %c0_26] : memref<16x128xf32, #tpu.memory_space<vmem>>, vector<16x128xf32>
      %c0_27 = arith.constant 0 : index
      %c0_28 = arith.constant 0 : index
      %37 = vector.load %arg8[%c0_27, %c0_28] : memref<1x128xf32, #tpu.memory_space<vmem>>, vector<1x128xf32>
      %38 = vector.broadcast %37 : vector<1x128xf32> to vector<16x128xf32>
      %39 = arith.addf %36, %38 : vector<16x128xf32>
      %c0_29 = arith.constant 0 : index
      %c0_30 = arith.constant 0 : index
      %40 = vector.load %arg9[%c0_29, %c0_30] : memref<16x128xf32, #tpu.memory_space<vmem>>, vector<16x128xf32>
      tpu.vector_store %arg9[%c0_29, %c0_30], %39 {strides = array<i32>} : memref<16x128xf32, #tpu.memory_space<vmem>>, vector<16x128xf32>,
    } else {
    }
    return
  }
  func.func @transform_0(%arg0: i32, %arg1: i32) -> (i32, i32) {
    %c0_i32 = arith.constant 0 : i32
    %c0_i32_0 = arith.constant 0 : i32
    return %arg0, %c0_i32 : i32, i32
  }
  func.func @transform_1(%arg0: i32, %arg1: i32) -> (i32, i32) {
    %c0_i32 = arith.constant 0 : i32
    %c0_i32_0 = arith.constant 0 : i32
    %c0_i32_1 = arith.constant 0 : i32
    return %c0_i32, %c0_i32_0 : i32, i32
  }
  func.func @transform_2(%arg0: i32, %arg1: i32) -> (i32, i32) {
    %c0_i32 = arith.constant 0 : i32
    %c0_i32_0 = arith.constant 0 : i32
    %c0_i32_1 = arith.constant 0 : i32
    return %c0_i32, %c0_i32_0 : i32, i32
  }
  func.func @transform_3(%arg0: i32, %arg1: i32) -> (i32, i32, i32) {
    %c0_i32 = arith.constant 0 : i32
    %c0_i32_0 = arith.constant 0 : i32
    %c0_i32_1 = arith.constant 0 : i32
    return %c0_i32, %c0_i32_0, %arg1 : i32, i32, i32
  }
  func.func @transform_4(%arg0: i32, %arg1: i32) -> (i32, i32, i32) {
    %c0_i32 = arith.constant 0 : i32
    %c0_i32_0 = arith.constant 0 : i32
    %c0_i32_1 = arith.constant 0 : i32
    return %c0_i32, %c0_i32_0, %arg1 : i32, i32, i32
  }
  func.func @transform_5(%arg0: i32, %arg1: i32) -> (i32, i32) {
    %c0_i32 = arith.constant 0 : i32
    %c0_i32_0 = arith.constant 0 : i32
    return %arg1, %c0_i32 : i32, i32
  }
  func.func @transform_6(%arg0: i32, %arg1: i32) -> (i32, i32) {
    %c0_i32 = arith.constant 0 : i32
    %c0_i32_0 = arith.constant 0 : i32
    %c0_i32_1 = arith.constant 0 : i32
    return %c0_i32, %c0_i32_0 : i32, i32
  }
  func.func @transform_7(%arg0: i32, %arg1: i32) -> (i32, i32) {
    %c0_i32 = arith.constant 0 : i32
    %c0_i32_0 = arith.constant 0 : i32
    return %arg0, %c0_i32 : i32, i32
  }
}

</mosaic_0001>

<llo_original>
// kernel: mlp_forward.1
$region0: #{mlp_forward.1}
  #allocation0 [shape = 'u32[]', space=smem, size = 0x4, offset = 0x4, fixed_abs, tag = 'smem constant byte address 0x4 - core index']
  #allocation1 [shape = 'u32[144,128]{1,0:T(1,128)}', space=vmem, size = 0x12000, scoped, tag = 'internal scratch']
  #allocation2 [shape = 'bf16[16,128]{1,0:T(8,128)(2,1)}', space=vmem, size = 0x1000, scoped, tag = 'scratch operand']
  #allocation3 [shape = 'f32[16,128]{1,0:T(8,128)}', space=vmem, size = 0x2000, scoped, tag = 'scratch operand']
  %s0 = inlined_call_operand.vmem [shape: bf16[16,32], index: 0, kind: input, shape index: {}]
  %s1 = inlined_call_operand.vmem [shape: bf16[32,128], index: 1, kind: input, shape index: {}]
  %s2 = inlined_call_operand.vmem [shape: f32[1,128], index: 2, kind: input, shape index: {}]
  %s3 = inlined_call_operand.hbm [shape: bf16[2,128,128], index: 3, kind: input, shape index: {}]
  %s4 = inlined_call_operand.vmem [shape: f32[2,1,128], index: 4, kind: input, shape index: {}]
  %s5 = inlined_call_operand.hbm [shape: bf16[128,128], index: 5, kind: input, shape index: {}]
  %s6 = inlined_call_operand.vmem [shape: f32[1,128], index: 6, kind: input, shape index: {}]
  %s7 = inlined_call_operand.vmem [shape: f32[16,128], index: 7, kind: output, shape index: {}]
  %s8 = sld [smem:[#allocation0]]
  $region54: #{mlp_forward.1} parent=0
    _
  %s10 = ssub.s32 1, %s8
  %s11 = scalar_select 0, %s10, %s8
  $region1: #{mlp_forward.1} parent=0
    #allocation4 [shape = 'u8[65536]{0}', space=vmem, size = 0x10000, scoped, tag = 'input window, operand 3, single buffered']
    #allocation5 [shape = 's32[1]{0}', space=sflag, size = 0x4, scoped, tag = 'scoped memory for mlp_forward.1']
    #allocation6 [shape = 'u8[32768]{0}', space=vmem, size = 0x8000, scoped, tag = 'input window, operand 5, single buffered']
    #allocation7 [shape = 's32[1]{0}', space=sflag, size = 0x4, scoped, tag = 'scoped memory for mlp_forward.1']
    %12 = vsyncpa [#allocation5], 0
    %13 = vsyncpa [#allocation7], 0
    // Predicated region
    $region2: #{mlp_forward.1} parent=1 // pred_check
      _
    $region3: #{mlp_forward.1} parent=1 // pred_check_branch
      %15 = sbr.rel (0) target = $region5
    $region4: #{mlp_forward.1} parent=1 // pred_region
      _
    $region5: #{mlp_forward.1} parent=1 // pred_fallthru
      _
    // Predicated region
    $region6: #{mlp_forward.1} parent=1 // pred_check
      _
    $region7: #{mlp_forward.1} parent=1 // pred_check_branch
      %17 = sbr.rel (0) target = $region9
    $region8: #{mlp_forward.1} parent=1 // pred_region
      _
    $region9: #{mlp_forward.1} parent=1 // pred_fallthru
      _
    // Predicated region
    $region10: #{mlp_forward.1} parent=1 // pred_check
      _
    $region11: #{mlp_forward.1} parent=1 // pred_check_branch
      %19 = sbr.rel (0) target = $region13
    $region12: #{mlp_forward.1} parent=1 // pred_region
      _
    $region13: #{mlp_forward.1} parent=1 // pred_fallthru
      _
    // Predicated region
    $region14: #{mlp_forward.1} parent=1 // pred_check
      _
    $region15: #{mlp_forward.1} parent=1 // pred_check_branch
      %21 = sbr.rel (0) target = $region17
    $region16: #{mlp_forward.1} parent=1 // pred_region
      %s23 = ssub.s32 2048, 2048
      %24 = vsyncadd [#allocation5], %s23
      %s25 = sshll.u32 [#allocation4], 4
      %s26 = int_to_ptr.vmem [resolvable:$true] %s25
      %31 = dma.hbm_to_vmem [thread:$0]  %s3, 2048, %s26, [#allocation5], 64, 64, 4
    $region17: #{mlp_forward.1} parent=1 // pred_fallthru
      _
    // Predicated region
    $region18: #{mlp_forward.1} parent=1 // pred_check
      _
    $region19: #{mlp_forward.1} parent=1 // pred_check_branch
      %33 = sbr.rel (0) target = $region21
    $region20: #{mlp_forward.1} parent=1 // pred_region
      _
    $region21: #{mlp_forward.1} parent=1 // pred_fallthru
      _
    // Predicated region
    $region22: #{mlp_forward.1} parent=1 // pred_check
      _
    $region23: #{mlp_forward.1} parent=1 // pred_check_branch
      %35 = sbr.rel (0) target = $region25
    $region24: #{mlp_forward.1} parent=1 // pred_region
      %s37 = ssub.s32 1024, 1024
      %38 = vsyncadd [#allocation7], %s37
      %s39 = sshll.u32 [#allocation6], 4
      %s40 = int_to_ptr.vmem [resolvable:$true] %s39
      %45 = dma.hbm_to_vmem [thread:$0]  %s5, 1024, %s40, [#allocation7], 64, 64, 4
    $region25: #{mlp_forward.1} parent=1 // pred_fallthru
      _
    // Predicated region
    $region26: #{mlp_forward.1} parent=1 // pred_check
      _
    $region27: #{mlp_forward.1} parent=1 // pred_check_branch
      %47 = sbr.rel (0) target = $region29
    $region28: #{mlp_forward.1} parent=1 // pred_region
      _
    $region29: #{mlp_forward.1} parent=1 // pred_fallthru
      _
    // Predicated region
    $region30: #{mlp_forward.1} parent=1 // pred_check
      _
    $region31: #{mlp_forward.1} parent=1 // pred_check_branch
      %49 = sbr.rel (0) target = $region33
    $region32: #{mlp_forward.1} parent=1 // pred_region
      %50 = dma.done [#allocation5], 2048
    $region33: #{mlp_forward.1} parent=1 // pred_fallthru
      _
    // Predicated region
    $region34: #{mlp_forward.1} parent=1 // pred_check
      _
    $region35: #{mlp_forward.1} parent=1 // pred_check_branch
      %52 = sbr.rel (0) target = $region37
    $region36: #{mlp_forward.1} parent=1 // pred_region
      %53 = dma.done [#allocation7], 1024
    $region37: #{mlp_forward.1} parent=1 // pred_fallthru
      _
    %p55 = scmp.eq.s32.totalorder 0, 0
    // Predicated region
    $region38: #{mlp_forward.1} parent=1 // pred_check
      %p56 = pneg %p55
    $region39: #{mlp_forward.1} parent=1 // pred_check_branch
      %58 = sbr.rel (%p56) target = $region41
    $region40: #{mlp_forward.1} parent=1 // pred_region
      %v59 = vld [vmem:[%s0] sm:$0xf]
      %v60 = vld [vmem:[%s0 + $0x4] sm:$0xf]
      %v61 = vld [vmem:[%s1] sm:$0xf]
      %v62 = vld [vmem:[%s1 + $0x4] sm:$0xf]
      %v63 = vld [vmem:[%s1 + $0x8] sm:$0xf]
      %v64 = vld [vmem:[%s1 + $0xc] sm:$0xf]
      %v65 = vld [vmem:[%s2] sm:$0x1]
      %v67 = vlaneseq
      %v68 = vshrl.u32 %v67, 7
      %v69 = vsub.s32 0, %v68
      %v70 = vrot.slane %v65, %v69
      %v74 = vunpack.c.l.b16 %v59
      %v75 = vunpack.c.l.b16 %v60
      %v76 = vpack.c.b16 %v75, %v74
      %v81 = vunpack.c.l.b16 %v61
      %v82 = vunpack.c.l.b16 %v62
      %v83 = vunpack.c.l.b16 %v63
      %v84 = vunpack.c.l.b16 %v64
      %v85 = vpack.c.b16 %v82, %v81
      %v86 = vpack.c.b16 %v84, %v83
      %vm89 = vcmask 261120
      %v91 = vsel %vm89, %v76, 0
      %93 = vmatprep.subr.bf16.mxu0 0
      %94 = vmatpush1.bf16.msra.mxu0 0
      %95 = vmatprep.subr.bf16.mxu0 0
      %96 = vmatpush1.bf16.msra.mxu0 0
      %97 = vmatprep.subr.bf16.mxu0 0
      %98 = vmatpush1.bf16.msra.mxu0 0
      %99 = vmatprep.subr.bf16.mxu0 0
      %100 = vmatpush1.bf16.msra.mxu0 0
      %101 = vmatprep.subr.bf16.mxu0 0
      %102 = vmatpush1.bf16.msra.mxu0 0
      %103 = vmatprep.subr.bf16.mxu0 0
      %104 = vmatpush1.bf16.msra.mxu0 0
      %105 = vmatprep.subr.bf16.mxu0 0
      %106 = vmatpush1.bf16.msra.mxu0 %v86
      %107 = vmatprep.subr.bf16.mxu0 0
      %108 = vmatpush1.bf16.msra.mxu0 %v85
      %109 = vmatprep.subr.bf16.mxu0 0
      %110 = vmatpush2.bf16.msra.mxu0 0
      %111 = vmatprep.subr.bf16.mxu0 0
      %112 = vmatpush2.bf16.msra.mxu0 0
      %113 = vmatprep.subr.bf16.mxu0 0
      %114 = vmatpush2.bf16.msra.mxu0 0
      %115 = vmatprep.subr.bf16.mxu0 0
      %116 = vmatpush2.bf16.msra.mxu0 0
      %117 = vmatprep.subr.bf16.mxu0 0
      %118 = vmatpush2.bf16.msra.mxu0 0
      %119 = vmatprep.subr.bf16.mxu0 0
      %120 = vmatpush2.bf16.msra.mxu0 0
      %121 = vmatprep.subr.bf16.mxu0 0
      %122 = vmatpush2.bf16.msra.mxu0 0
      %123 = vmatprep.subr.bf16.mxu0 0
      %124 = vmatpush2.bf16.msra.mxu0 0
      %125 = vmatprep.mubr.bf16.mxu0 0
      %126 = vmatmul.mubr.bf16.gmra.mxu0 %v91
      %v127 = vpop.f32.mrf.mxu0
      %v128 = vadd.f32 %v70, %v127
      %v129 = vpop.f32.mrf.mxu0
      %v130 = vpop.f32.mrf.mxu0
      %v131 = vadd.f32 %v70, %v130
      %v132 = vpop.f32.mrf.mxu0
      %133 = vdwg.mxu0
      %v134 = vxor.u32 %v128, 2147483648
      %v135 = vxor.u32 %v131, 2147483648
      %v136 = vmul.f32 %v134, 1.442695
      %v137 = vpow.pop %v136
      %v138 = vmul.f32 %v135, 1.442695
      %v139 = vpow.pop %v138
      %v140 = vadd.f32 %v137, 1.0
      %v141 = vadd.f32 %v139, 1.0
      %v142 = vrcp.pop %v140
      %v143 = vmul.f32 1.0, %v142
      %v144 = vrcp.pop %v141
      %v145 = vmul.f32 1.0, %v144
      %v146 = vmul.f32 %v128, %v143
      %v147 = vmul.f32 %v131, %v145
      %v148 = vpack.c.bf16 %v147, %v146
      %v150 = vunpack.c.l.b16 %v148
      %v151 = vunpack.c.h.b16 %v148
      %v152 = vpack.c.b16 %v150, %v150
      %v153 = vpack.c.b16 %v151, %v151
      %156 = vst [vmem:[#allocation2] sm:$0xf] %v152
      %157 = vst [vmem:[#allocation2 + $0x4] sm:$0xf] %v153
      %158 = vst [vmem:[#allocation3] sm:$0xff] 0.0
      %159 = vst [vmem:[#allocation3 + $0x8] sm:$0xff] 0.0
    $region41: #{mlp_forward.1} parent=1 // pred_fallthru
      _
    %v160 = vld [vmem:[#allocation2] sm:$0xf]
    %v161 = vld [vmem:[#allocation2 + $0x4] sm:$0xf]
    %v162 = vld [vmem:[#allocation4] sm:$0xf]
    %v163 = vld [vmem:[#allocation4 + $0x4] sm:$0xf]
    %v164 = vld [vmem:[#allocation4 + $0x8] sm:$0xf]
    %v165 = vld [vmem:[#allocation4 + $0xc] sm:$0xf]
    %v166 = vld [vmem:[#allocation4 + $0x10] sm:$0xf]
    %v167 = vld [vmem:[#allocation4 + $0x14] sm:$0xf]
    %v168 = vld [vmem:[#allocation4 + $0x18] sm:$0xf]
    %v169 = vld [vmem:[#allocation4 + $0x1c] sm:$0xf]
    %v170 = vld [vmem:[#allocation4 + $0x20] sm:$0xf]
    %v171 = vld [vmem:[#allocation4 + $0x24] sm:$0xf]
    %v172 = vld [vmem:[#allocation4 + $0x28] sm:$0xf]
    %v173 = vld [vmem:[#allocation4 + $0x2c] sm:$0xf]
    %v174 = vld [vmem:[#allocation4 + $0x30] sm:$0xf]
    %v175 = vld [vmem:[#allocation4 + $0x34] sm:$0xf]
    %v176 = vld [vmem:[#allocation4 + $0x38] sm:$0xf]
    %v177 = vld [vmem:[#allocation4 + $0x3c] sm:$0xf]
    %v178 = vld [vmem:[%s4] sm:$0x1]
    %v180 = vlaneseq
    %v181 = vshrl.u32 %v180, 7
    %v182 = vsub.s32 0, %v181
    %v183 = vrot.slane %v178, %v182
    %v187 = vunpack.c.l.b16 %v160
    %v188 = vunpack.c.l.b16 %v161
    %v189 = vpack.c.b16 %v188, %v187
    %v207 = vunpack.c.l.b16 %v162
    %v208 = vunpack.c.l.b16 %v163
    %v209 = vunpack.c.l.b16 %v164
    %v210 = vunpack.c.l.b16 %v165
    %v211 = vunpack.c.l.b16 %v166
    %v212 = vunpack.c.l.b16 %v167
    %v213 = vunpack.c.l.b16 %v168
    %v214 = vunpack.c.l.b16 %v169
    %v215 = vunpack.c.l.b16 %v170
    %v216 = vunpack.c.l.b16 %v171
    %v217 = vunpack.c.l.b16 %v172
    %v218 = vunpack.c.l.b16 %v173
    %v219 = vunpack.c.l.b16 %v174
    %v220 = vunpack.c.l.b16 %v175
    %v221 = vunpack.c.l.b16 %v176
    %v222 = vunpack.c.l.b16 %v177
    %v223 = vpack.c.b16 %v208, %v207
    %v224 = vpack.c.b16 %v210, %v209
    %v225 = vpack.c.b16 %v212, %v211
    %v226 = vpack.c.b16 %v214, %v213
    %v227 = vpack.c.b16 %v216, %v215
    %v228 = vpack.c.b16 %v218, %v217
    %v229 = vpack.c.b16 %v220, %v219
    %v230 = vpack.c.b16 %v222, %v221
    %239 = vmatprep.subr.bf16.mxu0 0
    %240 = vmatpush1.bf16.msra.mxu0 %v230
    %241 = vmatprep.subr.bf16.mxu0 0
    %242 = vmatpush1.bf16.msra.mxu0 %v229
    %243 = vmatprep.subr.bf16.mxu0 0
    %244 = vmatpush1.bf16.msra.mxu0 %v228
    %245 = vmatprep.subr.bf16.mxu0 0
    %246 = vmatpush1.bf16.msra.mxu0 %v227
    %247 = vmatprep.subr.bf16.mxu0 0
    %248 = vmatpush1.bf16.msra.mxu0 %v226
    %249 = vmatprep.subr.bf16.mxu0 0
    %250 = vmatpush1.bf16.msra.mxu0 %v225
    %251 = vmatprep.subr.bf16.mxu0 0
    %252 = vmatpush1.bf16.msra.mxu0 %v224
    %253 = vmatprep.subr.bf16.mxu0 0
    %254 = vmatpush1.bf16.msra.mxu0 %v223
    %255 = vmatprep.subr.bf16.mxu0 0
    %256 = vmatpush2.bf16.msra.mxu0 0
    %257 = vmatprep.subr.bf16.mxu0 0
    %258 = vmatpush2.bf16.msra.mxu0 0
    %259 = vmatprep.subr.bf16.mxu0 0
    %260 = vmatpush2.bf16.msra.mxu0 0
    %261 = vmatprep.subr.bf16.mxu0 0
    %262 = vmatpush2.bf16.msra.mxu0 0
    %263 = vmatprep.subr.bf16.mxu0 0
    %264 = vmatpush2.bf16.msra.mxu0 0
    %265 = vmatprep.subr.bf16.mxu0 0
    %266 = vmatpush2.bf16.msra.mxu0 0
    %267 = vmatprep.subr.bf16.mxu0 0
    %268 = vmatpush2.bf16.msra.mxu0 0
    %269 = vmatprep.subr.bf16.mxu0 0
    %270 = vmatpush2.bf16.msra.mxu0 0
    %271 = vmatprep.mubr.bf16.mxu0 0
    %272 = vmatmul.mubr.bf16.gmra.mxu0 %v189
    %v273 = vpop.f32.mrf.mxu0
    %v274 = vadd.f32 %v183, %v273
    %v275 = vpop.f32.mrf.mxu0
    %v276 = vpop.f32.mrf.mxu0
    %v277 = vadd.f32 %v183, %v276
    %v278 = vpop.f32.mrf.mxu0
    %279 = vdwg.mxu0
    %s280 = scalar_lea.vmem [#allocation4], 64
    %v281 = vld [vmem:[%s280] sm:$0xf]
    %v282 = vld [vmem:[%s280 + $0x4] sm:$0xf]
    %v283 = vld [vmem:[%s280 + $0x8] sm:$0xf]
    %v284 = vld [vmem:[%s280 + $0xc] sm:$0xf]
    %v285 = vld [vmem:[%s280 + $0x10] sm:$0xf]
    %v286 = vld [vmem:[%s280 + $0x14] sm:$0xf]
    %v287 = vld [vmem:[%s280 + $0x18] sm:$0xf]
    %v288 = vld [vmem:[%s280 + $0x1c] sm:$0xf]
    %v289 = vld [vmem:[%s280 + $0x20] sm:$0xf]
    %v290 = vld [vmem:[%s280 + $0x24] sm:$0xf]
    %v291 = vld [vmem:[%s280 + $0x28] sm:$0xf]
    %v292 = vld [vmem:[%s280 + $0x2c] sm:$0xf]
    %v293 = vld [vmem:[%s280 + $0x30] sm:$0xf]
    %v294 = vld [vmem:[%s280 + $0x34] sm:$0xf]
    %v295 = vld [vmem:[%s280 + $0x38] sm:$0xf]
    %v296 = vld [vmem:[%s280 + $0x3c] sm:$0xf]
    %s297 = scalar_lea.vmem %s4, 1
    %v298 = vld [vmem:[%s297] sm:$0x1]
    %v300 = vlaneseq
    %v301 = vshrl.u32 %v300, 7
    %v302 = vsub.s32 0, %v301
    %v303 = vrot.slane %v298, %v302
    %v321 = vunpack.c.l.b16 %v281
    %v322 = vunpack.c.l.b16 %v282
    %v323 = vunpack.c.l.b16 %v283
    %v324 = vunpack.c.l.b16 %v284
    %v325 = vunpack.c.l.b16 %v285
    %v326 = vunpack.c.l.b16 %v286
    %v327 = vunpack.c.l.b16 %v287
    %v328 = vunpack.c.l.b16 %v288
    %v329 = vunpack.c.l.b16 %v289
    %v330 = vunpack.c.l.b16 %v290
    %v331 = vunpack.c.l.b16 %v291
    %v332 = vunpack.c.l.b16 %v292
    %v333 = vunpack.c.l.b16 %v293
    %v334 = vunpack.c.l.b16 %v294
    %v335 = vunpack.c.l.b16 %v295
    %v336 = vunpack.c.l.b16 %v296
    %v337 = vpack.c.b16 %v322, %v321
    %v338 = vpack.c.b16 %v324, %v323
    %v339 = vpack.c.b16 %v326, %v325
    %v340 = vpack.c.b16 %v328, %v327
    %v341 = vpack.c.b16 %v330, %v329
    %v342 = vpack.c.b16 %v332, %v331
    %v343 = vpack.c.b16 %v334, %v333
    %v344 = vpack.c.b16 %v336, %v335
    %353 = vmatprep.subr.bf16.mxu0 0
    %354 = vmatpush1.bf16.msra.mxu0 %v344
    %355 = vmatprep.subr.bf16.mxu0 0
    %356 = vmatpush1.bf16.msra.mxu0 %v343
    %357 = vmatprep.subr.bf16.mxu0 0
    %358 = vmatpush1.bf16.msra.mxu0 %v342
    %359 = vmatprep.subr.bf16.mxu0 0
    %360 = vmatpush1.bf16.msra.mxu0 %v341
    %361 = vmatprep.subr.bf16.mxu0 0
    %362 = vmatpush1.bf16.msra.mxu0 %v340
    %363 = vmatprep.subr.bf16.mxu0 0
    %364 = vmatpush1.bf16.msra.mxu0 %v339
    %365 = vmatprep.subr.bf16.mxu0 0
    %366 = vmatpush1.bf16.msra.mxu0 %v338
    %367 = vmatprep.subr.bf16.mxu0 0
    %368 = vmatpush1.bf16.msra.mxu0 %v337
    %369 = vmatprep.subr.bf16.mxu0 0
    %370 = vmatpush2.bf16.msra.mxu0 0
    %371 = vmatprep.subr.bf16.mxu0 0
    %372 = vmatpush2.bf16.msra.mxu0 0
    %373 = vmatprep.subr.bf16.mxu0 0
    %374 = vmatpush2.bf16.msra.mxu0 0
    %375 = vmatprep.subr.bf16.mxu0 0
    %376 = vmatpush2.bf16.msra.mxu0 0
    %377 = vmatprep.subr.bf16.mxu0 0
    %378 = vmatpush2.bf16.msra.mxu0 0
    %379 = vmatprep.subr.bf16.mxu0 0
    %380 = vmatpush2.bf16.msra.mxu0 0
    %381 = vmatprep.subr.bf16.mxu0 0
    %382 = vmatpush2.bf16.msra.mxu0 0
    %383 = vmatprep.subr.bf16.mxu0 0
    %384 = vmatpush2.bf16.msra.mxu0 0
    %385 = vmatprep.mubr.bf16.mxu0 0
    %386 = vmatmul.mubr.bf16.gmra.mxu0 %v189
    %v387 = vpop.f32.mrf.mxu0
    %v388 = vadd.f32 %v303, %v387
    %v389 = vpop.f32.mrf.mxu0
    %v390 = vpop.f32.mrf.mxu0
    %v391 = vadd.f32 %v303, %v390
    %v392 = vpop.f32.mrf.mxu0
    %393 = vdwg.mxu0
    %s394 = smul.u32 0, 128
    %s395 = sshra.s32 %s394, 7
    %s396 = sand.u32 %s394, 127
    %s397 = smul.addr %s395, 4
    %s398 = scalar_lea.vmem [#allocation2], %s397
    %v399 = vld [vmem:[%s398] sm:$0xf]
    %v400 = vld [vmem:[%s398 + $0x4] sm:$0xf]
    %v401 = vunpack.c.l.bf16 %v399
    %v402 = vunpack.c.l.bf16 %v400
    %v403 = vadd.f32 %v274, 1.0
    %v404 = vadd.f32 %v277, 1.0
    %v405 = vmul.f32 %v401, %v403
    %v406 = vmul.f32 %v402, %v404
    %v407 = vadd.f32 %v405, %v388
    %v408 = vadd.f32 %v406, %v391
    %v409 = vld [vmem:[#allocation3] sm:$0xff]
    %v410 = vld [vmem:[#allocation3 + $0x8] sm:$0xff]
    %v411 = vpack.c.bf16 %v408, %v407
    %v412 = vld [vmem:[#allocation6] sm:$0xf]
    %v413 = vld [vmem:[#allocation6 + $0x4] sm:$0xf]
    %v414 = vld [vmem:[#allocation6 + $0x8] sm:$0xf]
    %v415 = vld [vmem:[#allocation6 + $0xc] sm:$0xf]
    %v416 = vld [vmem:[#allocation6 + $0x10] sm:$0xf]
    %v417 = vld [vmem:[#allocation6 + $0x14] sm:$0xf]
    %v418 = vld [vmem:[#allocation6 + $0x18] sm:$0xf]
    %v419 = vld [vmem:[#allocation6 + $0x1c] sm:$0xf]
    %v420 = vld [vmem:[#allocation6 + $0x20] sm:$0xf]
    %v421 = vld [vmem:[#allocation6 + $0x24] sm:$0xf]
    %v422 = vld [vmem:[#allocation6 + $0x28] sm:$0xf]
    %v423 = vld [vmem:[#allocation6 + $0x2c] sm:$0xf]
    %v424 = vld [vmem:[#allocation6 + $0x30] sm:$0xf]
    %v425 = vld [vmem:[#allocation6 + $0x34] sm:$0xf]
    %v426 = vld [vmem:[#allocation6 + $0x38] sm:$0xf]
    %v427 = vld [vmem:[#allocation6 + $0x3c] sm:$0xf]
    %v444 = vunpack.c.l.b16 %v412
    %v445 = vunpack.c.l.b16 %v413
    %v446 = vunpack.c.l.b16 %v414
    %v447 = vunpack.c.l.b16 %v415
    %v448 = vunpack.c.l.b16 %v416
    %v449 = vunpack.c.l.b16 %v417
    %v450 = vunpack.c.l.b16 %v418
    %v451 = vunpack.c.l.b16 %v419
    %v452 = vunpack.c.l.b16 %v420
    %v453 = vunpack.c.l.b16 %v421
    %v454 = vunpack.c.l.b16 %v422
    %v455 = vunpack.c.l.b16 %v423
    %v456 = vunpack.c.l.b16 %v424
    %v457 = vunpack.c.l.b16 %v425
    %v458 = vunpack.c.l.b16 %v426
    %v459 = vunpack.c.l.b16 %v427
    %v460 = vpack.c.b16 %v445, %v444
    %v461 = vpack.c.b16 %v447, %v446
    %v462 = vpack.c.b16 %v449, %v448
    %v463 = vpack.c.b16 %v451, %v450
    %v464 = vpack.c.b16 %v453, %v452
    %v465 = vpack.c.b16 %v455, %v454
    %v466 = vpack.c.b16 %v457, %v456
    %v467 = vpack.c.b16 %v459, %v458
    %476 = vmatprep.subr.bf16.mxu0 0
    %477 = vmatpush1.bf16.msra.mxu0 %v467
    %478 = vmatprep.subr.bf16.mxu0 0
    %479 = vmatpush1.bf16.msra.mxu0 %v466
    %480 = vmatprep.subr.bf16.mxu0 0
    %481 = vmatpush1.bf16.msra.mxu0 %v465
    %482 = vmatprep.subr.bf16.mxu0 0
    %483 = vmatpush1.bf16.msra.mxu0 %v464
    %484 = vmatprep.subr.bf16.mxu0 0
    %485 = vmatpush1.bf16.msra.mxu0 %v463
    %486 = vmatprep.subr.bf16.mxu0 0
    %487 = vmatpush1.bf16.msra.mxu0 %v462
    %488 = vmatprep.subr.bf16.mxu0 0
    %489 = vmatpush1.bf16.msra.mxu0 %v461
    %490 = vmatprep.subr.bf16.mxu0 0
    %491 = vmatpush1.bf16.msra.mxu0 %v460
    %492 = vmatprep.subr.bf16.mxu0 0
    %493 = vmatpush2.bf16.msra.mxu0 0
    %494 = vmatprep.subr.bf16.mxu0 0
    %495 = vmatpush2.bf16.msra.mxu0 0
    %496 = vmatprep.subr.bf16.mxu0 0
    %497 = vmatpush2.bf16.msra.mxu0 0
    %498 = vmatprep.subr.bf16.mxu0 0
    %499 = vmatpush2.bf16.msra.mxu0 0
    %500 = vmatprep.subr.bf16.mxu0 0
    %501 = vmatpush2.bf16.msra.mxu0 0
    %502 = vmatprep.subr.bf16.mxu0 0
    %503 = vmatpush2.bf16.msra.mxu0 0
    %504 = vmatprep.subr.bf16.mxu0 0
    %505 = vmatpush2.bf16.msra.mxu0 0
    %506 = vmatprep.subr.bf16.mxu0 0
    %507 = vmatpush2.bf16.msra.mxu0 0
    %508 = vmatprep.mubr.bf16.mxu0 0
    %509 = vmatmul.mubr.bf16.gmra.mxu0 %v411
    %v510 = vpop.f32.mrf.mxu0
    %v511 = vadd.f32 0.0, %v510
    %v512 = vpop.f32.mrf.mxu0
    %v513 = vpop.f32.mrf.mxu0
    %v514 = vadd.f32 0.0, %v513
    %v515 = vpop.f32.mrf.mxu0
    %516 = vdwg.mxu0
    %v517 = vadd.f32 %v409, %v511
    %v518 = vadd.f32 %v410, %v514
    %519 = vst [vmem:[#allocation3] sm:$0xff] %v517
    %520 = vst [vmem:[#allocation3 + $0x8] sm:$0xff] %v518
    // Predicated region
    $region42: #{mlp_forward.1} parent=1 // pred_check
      %p521 = pneg %p55
    $region43: #{mlp_forward.1} parent=1 // pred_check_branch
      %523 = sbr.rel (%p521) target = $region45
    $region44: #{mlp_forward.1} parent=1 // pred_region
      %v524 = vld [vmem:[#allocation3] sm:$0xff]
      %v525 = vld [vmem:[#allocation3 + $0x8] sm:$0xff]
      %v526 = vld [vmem:[%s6] sm:$0x1]
      %v528 = vlaneseq
      %v529 = vshrl.u32 %v528, 7
      %v530 = vsub.s32 0, %v529
      %v531 = vrot.slane %v526, %v530
      %v533 = vadd.f32 %v524, %v531
      %v534 = vadd.f32 %v525, %v531
      %535 = vst [vmem:[%s7] sm:$0xff] %v533
      %536 = vst [vmem:[%s7 + $0x8] sm:$0xff] %v534
    $region45: #{mlp_forward.1} parent=1 // pred_fallthru
      _
    // Predicated region
    $region46: #{mlp_forward.1} parent=1 // pred_check
      _
    $region47: #{mlp_forward.1} parent=1 // pred_check_branch
      %538 = sbr.rel (0) target = $region49
    $region48: #{mlp_forward.1} parent=1 // pred_region
      _
    $region49: #{mlp_forward.1} parent=1 // pred_fallthru
      _
    // Predicated region
    $region50: #{mlp_forward.1} parent=1 // pred_check
      _
    $region51: #{mlp_forward.1} parent=1 // pred_check_branch
      %540 = sbr.rel (0) target = $region53
    $region52: #{mlp_forward.1} parent=1 // pred_region
      _
    $region53: #{mlp_forward.1} parent=1 // pred_fallthru
      _
    %541 = vsyncpa [#allocation5], 1
    %542 = vsyncpa [#allocation7], 1

</llo_original>
